<compile_context>
chip_gen: v5e
topology: v5e:2x2
jax: 0.10.0
libtpu: 0.0.40
codegen_flags: <defaults>
</compile_context>

<pallas_src>
import functools
import math

import jax
import jax.numpy as jnp
from jax.experimental import pallas as pl
from jax.experimental.pallas import tpu as pltpu


def _cdiv(a, b):
    return -(-a // b)


def _round_up(a, b):
    return _cdiv(a, b) * b


def _nerf_pos_kernel(x_ref, out_ref, *, half, log_temp):
    """x_ref: (TM, G) f32 flattened positions; out_ref: (TM, G * 2*half) f32."""
    feat = 2 * half              # features per input element (64)
    chunk = 2 * feat             # lanes per pair of elements (128 = one vreg row)
    tm, g = x_ref.shape

    # Per-lane constants for one 128-wide chunk, rebuilt from a 2-D iota
    # (one vreg of cheap scalar/VPU work per grid step, hoisted out of the
    # pair loop).  Powers of two -> bitwise math.
    lane = jax.lax.broadcasted_iota(jnp.int32, (1, chunk), 1)
    within = jnp.bitwise_and(lane, feat - 1)              # lane % 64
    freq = jnp.bitwise_and(within, half - 1)              # frequency index
    # 1 / dim_t[freq] = exp(-2 * trunc(freq/2) / half * log(temperature))
    inv = jnp.exp(jnp.right_shift(freq, 1).astype(jnp.float32)
                  * jnp.float32(-2.0 * log_temp / half))
    # cos(v) == sin(v + pi/2): one transcendental per lane, 100% lane use.
    phase = jnp.where(within >= half,
                      jnp.float32(0.5 * math.pi), jnp.float32(0.0))
    is_first = lane < feat                                # element 2p vs 2p+1

    # Static unrolled loop over element pairs (G/2 = 4 chunks; small enough to
    # avoid vreg-pressure issues).  Each pair fills one 128-lane chunk.
    for p in range(g // 2):
        xa = jnp.broadcast_to(x_ref[:, 2 * p:2 * p + 1], (tm, chunk))
        xb = jnp.broadcast_to(x_ref[:, 2 * p + 1:2 * p + 2], (tm, chunk))
        # select + mul + add per output vreg; no zero-masked inv -> no 0*inf.
        xab = jnp.where(is_first, xa, xb)
        out_ref[:, p * chunk:(p + 1) * chunk] = jnp.sin(xab * inv + phase)


def position_embedding_nerf(x, num_pos_feats=64, temperature=10000.0,
                            normalize=False, scale=None,
                            *, group=8, block_rows=2048):
    """JAX/Pallas equivalent of PositionEmbeddingNerf.forward (2-D or 3-D x)."""
    if scale is not None and normalize is False:
        raise ValueError("normalize should be True if scale is passed")
    if scale is None:
        scale = 2 * math.pi
    # NOTE: the PyTorch forward never uses `scale` / `normalize` either.

    half = num_pos_feats // 2
    feat = 2 * half
    if feat != 64:
        # TODO(synk): generalize the 128-lane pairing fast path to 2*half != 64.
        raise NotImplementedError("kernel is specialized to num_pos_feats == 64")
    if group % 2 != 0 or block_rows % 8 != 0:
        raise ValueError("group must be even and block_rows a multiple of 8")

    x = x.astype(jnp.float32)
    orig_shape = x.shape                      # (N, C) or (B, N, C)
    M = int(x.size)

    G = group
    rows = _cdiv(M, G)

    # Tile-size selection:
    #  * never larger than the data (avoids massive padding on small inputs),
    #  * >= 2 grid steps when possible so v7x can shard across both TCs,
    #  * multiple of 8 sublanes.
    tm = min(block_rows, _round_up(rows, 8))
    if rows > 8:
        tm = min(tm, max(8, _round_up(_cdiv(rows, 2), 8)))
    tm = max(8, (tm // 8) * 8)

    rows_padded = _round_up(rows, tm)
    M_padded = rows_padded * G
    grid = rows_padded // tm

    x_flat = x.reshape(-1)
    if M_padded != M:
        x_flat = jnp.pad(x_flat, (0, M_padded - M))
    x2d = x_flat.reshape(rows_padded, G)

    kernel = functools.partial(_nerf_pos_kernel, half=half,
                               log_temp=math.log(float(temperature)))

    # VMEM budget: double-buffered output block + lane-padded input buffer
    # ((TM, 8) lands as TM x 128 lanes in VMEM) + headroom for elementwise
    # temporaries.  Pin it explicitly so the tile never silently shrinks.
    out_block_bytes = tm * G * feat * 4
    in_block_bytes = tm * 128 * 4
    vmem_limit = min(2 * (out_block_bytes + in_block_bytes) + (16 << 20),
                     60 << 20)

    out2d = pl.pallas_call(
        kernel,
        out_shape=jax.ShapeDtypeStruct((rows_padded, G * feat), jnp.float32),
        grid_spec=pltpu.PrefetchScalarGridSpec(
            num_scalar_prefetch=0,
            grid=(grid,),
            in_specs=[pl.BlockSpec((tm, G), lambda i: (i, 0))],
            out_specs=pl.BlockSpec((tm, G * feat), lambda i: (i, 0)),
        ),
        compiler_params=pltpu.CompilerParams(
            dimension_semantics=("parallel",),
            vmem_limit_bytes=vmem_limit,
        ),
    )(x2d)

    # (rows_padded, G*feat) is exactly the contiguous (M_padded, feat) layout,
    # so this reshape is a view.  The [:M] slice (an extra read+write of the
    # output) is only taken on the padded path.
    out = out2d.reshape(M_padded, feat)
    if M_padded != M:
        # TODO(synk): for write-bound end-to-end perf, prefer shapes where
        #             M % (tm*G) == 0 or let this slice fuse into the consumer.
        out = out[:M]
    return out.reshape(*orig_shape, feat)


def _reference(x, num_pos_feats=64, temperature=10000.0):
    half = num_pos_feats // 2
    idx = jnp.arange(half, dtype=jnp.float32)
    dim_t = jnp.asarray(temperature, jnp.float32) ** (
        2.0 * jnp.floor(idx / 2.0) / float(half))
    pos = x.astype(jnp.float32)[..., None] / dim_t
    return jnp.concatenate([jnp.sin(pos), jnp.cos(pos)], axis=-1)


if __name__ == "__main__":
    num_pos_feats = 64                     # module default -> half = 32

    # 3-D path, matching the module's (B, N, C) usage (no padding, no copy).
    B, N, C = 2, 8, 4
    x3 = jax.random.normal(jax.random.PRNGKey(0), (B, N, C), dtype=jnp.float32)
    out3 = jax.block_until_ready(position_embedding_nerf(x3, num_pos_feats))
    ref3 = _reference(x3, num_pos_feats)
    assert out3.shape == (B, N, C, num_pos_feats), out3.shape
    assert jnp.allclose(out3, ref3, atol=1e-5, rtol=1e-5), "3-D mismatch"

    # 2-D path.
    x2 = jax.random.normal(jax.random.PRNGKey(1), (N, C), dtype=jnp.float32)
    out2 = jax.block_until_ready(position_embedding_nerf(x2, num_pos_feats))
    ref2 = _reference(x2, num_pos_feats)
    assert out2.shape == (N, C, num_pos_feats), out2.shape
    assert jnp.allclose(out2, ref2, atol=1e-5, rtol=1e-5), "2-D mismatch"

    # Ragged path (exercises padding + multi-step grid + tail slice).
    Br, Nr, Cr = 3, 7, 5
    xr = jax.random.normal(jax.random.PRNGKey(2), (Br, Nr, Cr), dtype=jnp.float32)
    outr = jax.block_until_ready(position_embedding_nerf(xr, num_pos_feats))
    refr = _reference(xr, num_pos_feats)
    assert outr.shape == (Br, Nr, Cr, num_pos_feats), outr.shape
    assert jnp.allclose(outr, refr, atol=1e-5, rtol=1e-5), "ragged mismatch"

    print("KERNEL_OK")
</pallas_src>

<mosaic_0001>
module attributes {stable_mosaic.version = 11 : i64} {
  func.func @_nerf_pos_kernel(%arg0: i32, %arg1: memref<8x8xf32, #tpu.memory_space<vmem>>, %arg2: memref<8x512xf32, #tpu.memory_space<vmem>>) attributes {dimension_semantics = [#tpu.dimension_semantics<parallel>], iteration_bounds = array<i64: 1>, scalar_prefetch = 0 : i64, scratch_operands = 0 : i64, tpu.core_type = #tpu.core_type<tc>, window_params = [{transform_indices = @transform_0, window_bounds = array<i64: 8, 8>}, {transform_indices = @transform_1, window_bounds = array<i64: 8, 512>}]} {
    %0 = tpu.iota {dimensions = array<i32: 1>} : vector<1x128xi32>
    %c63_i32 = arith.constant 63 : i32
    %1 = vector.broadcast %c63_i32 : i32 to vector<1x128xi32>
    %2 = arith.andi %0, %1 : vector<1x128xi32>
    %c31_i32 = arith.constant 31 : i32
    %3 = vector.broadcast %c31_i32 : i32 to vector<1x128xi32>
    %4 = arith.andi %2, %3 : vector<1x128xi32>
    %c1_i32 = arith.constant 1 : i32
    %5 = vector.broadcast %c1_i32 : i32 to vector<1x128xi32>
    %6 = arith.shrsi %4, %5 : vector<1x128xi32>
    %7 = arith.sitofp %6 : vector<1x128xi32> to vector<1x128xf32>
    %cst = arith.constant -0.575646281 : f32
    %8 = vector.broadcast %cst : f32 to vector<1x128xf32>
    %9 = arith.mulf %7, %8 : vector<1x128xf32>
    %10 = math.exp %9 : vector<1x128xf32>
    %c32_i32 = arith.constant 32 : i32
    %11 = vector.broadcast %c32_i32 : i32 to vector<1x128xi32>
    %12 = arith.cmpi sge, %2, %11 : vector<1x128xi32>
    %cst_0 = arith.constant 1.57079637 : f32
    %cst_1 = arith.constant 0.000000e+00 : f32
    %13 = vector.broadcast %cst_0 : f32 to vector<1x128xf32>
    %14 = vector.broadcast %cst_1 : f32 to vector<1x128xf32>
    %15 = arith.select %12, %13, %14 : vector<1x128xi1>, vector<1x128xf32>
    %c64_i32 = arith.constant 64 : i32
    %16 = vector.broadcast %c64_i32 : i32 to vector<1x128xi32>
    %17 = arith.cmpi slt, %0, %16 : vector<1x128xi32>
    %c0 = arith.constant 0 : index
    %c0_2 = arith.constant 0 : index
    %18 = vector.load %arg1[%c0, %c0_2] : memref<8x8xf32, #tpu.memory_space<vmem>>, vector<8x1xf32>
    %19 = vector.shape_cast %18 : vector<8x1xf32> to vector<8x1xf32>
    %20 = vector.broadcast %19 : vector<8x1xf32> to vector<8x128xf32>
    %c0_3 = arith.constant 0 : index
    %c1 = arith.constant 1 : index
    %21 = vector.load %arg1[%c0_3, %c1] : memref<8x8xf32, #tpu.memory_space<vmem>>, vector<8x1xf32>
    %22 = vector.shape_cast %21 : vector<8x1xf32> to vector<8x1xf32>
    %23 = vector.broadcast %22 : vector<8x1xf32> to vector<8x128xf32>
    %24 = vector.shape_cast %17 : vector<1x128xi1> to vector<1x128xi1>
    %25 = vector.broadcast %24 : vector<1x128xi1> to vector<8x128xi1>
    %26 = arith.select %25, %20, %23 : vector<8x128xi1>, vector<8x128xf32>
    %27 = vector.broadcast %10 : vector<1x128xf32> to vector<8x128xf32>
    %28 = arith.mulf %26, %27 : vector<8x128xf32>
    %29 = vector.broadcast %15 : vector<1x128xf32> to vector<8x128xf32>
    %30 = arith.addf %28, %29 : vector<8x128xf32>
    %31 = math.sin %30 : vector<8x128xf32>
    %c0_4 = arith.constant 0 : index
    %c0_5 = arith.constant 0 : index
    %32 = vector.load %arg2[%c0_4, %c0_5] : memref<8x512xf32, #tpu.memory_space<vmem>>, vector<8x128xf32>
    tpu.vector_store %arg2[%c0_4, %c0_5], %31 {strides = array<i32>} : memref<8x512xf32, #tpu.memory_space<vmem>>, vector<8x128xf32>,
    %c0_6 = arith.constant 0 : index
    %c2 = arith.constant 2 : index
    %33 = vector.load %arg1[%c0_6, %c2] : memref<8x8xf32, #tpu.memory_space<vmem>>, vector<8x1xf32>
    %34 = vector.shape_cast %33 : vector<8x1xf32> to vector<8x1xf32>
    %35 = vector.broadcast %34 : vector<8x1xf32> to vector<8x128xf32>
    %c0_7 = arith.constant 0 : index
    %c3 = arith.constant 3 : index
    %36 = vector.load %arg1[%c0_7, %c3] : memref<8x8xf32, #tpu.memory_space<vmem>>, vector<8x1xf32>
    %37 = vector.shape_cast %36 : vector<8x1xf32> to vector<8x1xf32>
    %38 = vector.broadcast %37 : vector<8x1xf32> to vector<8x128xf32>
    %39 = vector.shape_cast %17 : vector<1x128xi1> to vector<1x128xi1>
    %40 = vector.broadcast %39 : vector<1x128xi1> to vector<8x128xi1>
    %41 = arith.select %40, %35, %38 : vector<8x128xi1>, vector<8x128xf32>
    %42 = vector.broadcast %10 : vector<1x128xf32> to vector<8x128xf32>
    %43 = arith.mulf %41, %42 : vector<8x128xf32>
    %44 = vector.broadcast %15 : vector<1x128xf32> to vector<8x128xf32>
    %45 = arith.addf %43, %44 : vector<8x128xf32>
    %46 = math.sin %45 : vector<8x128xf32>
    %c0_8 = arith.constant 0 : index
    %c128 = arith.constant 128 : index
    %47 = vector.load %arg2[%c0_8, %c128] : memref<8x512xf32, #tpu.memory_space<vmem>>, vector<8x128xf32>
    tpu.vector_store %arg2[%c0_8, %c128], %46 {strides = array<i32>} : memref<8x512xf32, #tpu.memory_space<vmem>>, vector<8x128xf32>,
    %c0_9 = arith.constant 0 : index
    %c4 = arith.constant 4 : index
    %48 = vector.load %arg1[%c0_9, %c4] : memref<8x8xf32, #tpu.memory_space<vmem>>, vector<8x1xf32>
    %49 = vector.shape_cast %48 : vector<8x1xf32> to vector<8x1xf32>
    %50 = vector.broadcast %49 : vector<8x1xf32> to vector<8x128xf32>
    %c0_10 = arith.constant 0 : index
    %c5 = arith.constant 5 : index
    %51 = vector.load %arg1[%c0_10, %c5] : memref<8x8xf32, #tpu.memory_space<vmem>>, vector<8x1xf32>
    %52 = vector.shape_cast %51 : vector<8x1xf32> to vector<8x1xf32>
    %53 = vector.broadcast %52 : vector<8x1xf32> to vector<8x128xf32>
    %54 = vector.shape_cast %17 : vector<1x128xi1> to vector<1x128xi1>
    %55 = vector.broadcast %54 : vector<1x128xi1> to vector<8x128xi1>
    %56 = arith.select %55, %50, %53 : vector<8x128xi1>, vector<8x128xf32>
    %57 = vector.broadcast %10 : vector<1x128xf32> to vector<8x128xf32>
    %58 = arith.mulf %56, %57 : vector<8x128xf32>
    %59 = vector.broadcast %15 : vector<1x128xf32> to vector<8x128xf32>
    %60 = arith.addf %58, %59 : vector<8x128xf32>
    %61 = math.sin %60 : vector<8x128xf32>
    %c0_11 = arith.constant 0 : index
    %c256 = arith.constant 256 : index
    %62 = vector.load %arg2[%c0_11, %c256] : memref<8x512xf32, #tpu.memory_space<vmem>>, vector<8x128xf32>
    tpu.vector_store %arg2[%c0_11, %c256], %61 {strides = array<i32>} : memref<8x512xf32, #tpu.memory_space<vmem>>, vector<8x128xf32>,
    %c0_12 = arith.constant 0 : index
    %c6 = arith.constant 6 : index
    %63 = vector.load %arg1[%c0_12, %c6] : memref<8x8xf32, #tpu.memory_space<vmem>>, vector<8x1xf32>
    %64 = vector.shape_cast %63 : vector<8x1xf32> to vector<8x1xf32>
    %65 = vector.broadcast %64 : vector<8x1xf32> to vector<8x128xf32>
    %c0_13 = arith.constant 0 : index
    %c7 = arith.constant 7 : index
    %66 = vector.load %arg1[%c0_13, %c7] : memref<8x8xf32, #tpu.memory_space<vmem>>, vector<8x1xf32>
    %67 = vector.shape_cast %66 : vector<8x1xf32> to vector<8x1xf32>
    %68 = vector.broadcast %67 : vector<8x1xf32> to vector<8x128xf32>
    %69 = vector.shape_cast %17 : vector<1x128xi1> to vector<1x128xi1>
    %70 = vector.broadcast %69 : vector<1x128xi1> to vector<8x128xi1>
    %71 = arith.select %70, %65, %68 : vector<8x128xi1>, vector<8x128xf32>
    %72 = vector.broadcast %10 : vector<1x128xf32> to vector<8x128xf32>
    %73 = arith.mulf %71, %72 : vector<8x128xf32>
    %74 = vector.broadcast %15 : vector<1x128xf32> to vector<8x128xf32>
    %75 = arith.addf %73, %74 : vector<8x128xf32>
    %76 = math.sin %75 : vector<8x128xf32>
    %c0_14 = arith.constant 0 : index
    %c384 = arith.constant 384 : index
    %77 = vector.load %arg2[%c0_14, %c384] : memref<8x512xf32, #tpu.memory_space<vmem>>, vector<8x128xf32>
    tpu.vector_store %arg2[%c0_14, %c384], %76 {strides = array<i32>} : memref<8x512xf32, #tpu.memory_space<vmem>>, vector<8x128xf32>,
    return
  }
  func.func @transform_0(%arg0: i32) -> (i32, i32) {
    %c0_i32 = arith.constant 0 : i32
    %c0_i32_0 = arith.constant 0 : i32
    return %arg0, %c0_i32 : i32, i32
  }
  func.func @transform_1(%arg0: i32) -> (i32, i32) {
    %c0_i32 = arith.constant 0 : i32
    %c0_i32_0 = arith.constant 0 : i32
    return %arg0, %c0_i32 : i32, i32
  }
}

</mosaic_0001>

<llo_original>
// kernel: tpu_custom_call.1
$region0: #{tpu_custom_call.1}
  #allocation0 [shape = 'u32[]', space=smem, size = 0x4, offset = 0x4, fixed_abs, tag = 'smem constant byte address 0x4 - core index']
  #allocation1 [shape = 'u32[72,128]{1,0:T(1,128)}', space=vmem, size = 0x9000, scoped, tag = 'internal scratch']
  %s0 = inlined_call_operand.hbm [shape: f32[8,8], index: 0, kind: input, shape index: {}]
  %s1 = inlined_call_operand.hbm [shape: f32[8,512], index: 1, kind: output, shape index: {}]
  %s2 = sld [smem:[#allocation0]]
  $region18: #{tpu_custom_call.1} parent=0
    _
  %s4 = ssub.s32 1, %s2
  %s5 = scalar_select 0, %s4, %s2
  $region1: #{tpu_custom_call.1} parent=0
    #allocation2 [shape = 'u8[4096]{0}', space=vmem, size = 0x1000, scoped, tag = 'input window, operand 0, single buffered']
    #allocation3 [shape = 's32[1]{0}', space=sflag, size = 0x4, scoped, tag = 'scoped memory for tpu_custom_call.1']
    #allocation4 [shape = 's32[1]{0}', space=sflag, size = 0x4, scoped, tag = 'scoped memory for tpu_custom_call.1']
    #allocation5 [shape = 'u8[16384]{0}', space=vmem, size = 0x4000, scoped, tag = 'output window, operand 0, single buffered']
    %6 = vsyncpa [#allocation3], 0
    %7 = vsyncpa [#allocation4], 0
    // Predicated region
    $region2: #{tpu_custom_call.1} parent=1 // pred_check
      _
    $region3: #{tpu_custom_call.1} parent=1 // pred_check_branch
      %9 = sbr.rel (0) target = $region5
    $region4: #{tpu_custom_call.1} parent=1 // pred_region
      %11 = vsyncadd [#allocation3], 0
      %s13 = sshll.u32 %s0, 4
      %s14 = int_to_ptr.hbm [resolvable:$true] %s13
      %s15 = sshll.u32 [#allocation2], 4
      %s16 = int_to_ptr.vmem [resolvable:$true] %s15
      %18 = dma.hbm_to_vmem [thread:$0]  %s14, 128, %s16, [#allocation3]
    $region5: #{tpu_custom_call.1} parent=1 // pred_fallthru
      _
    // Predicated region
    $region6: #{tpu_custom_call.1} parent=1 // pred_check
      _
    $region7: #{tpu_custom_call.1} parent=1 // pred_check_branch
      %20 = sbr.rel (0) target = $region9
    $region8: #{tpu_custom_call.1} parent=1 // pred_region
      %22 = dma.done [#allocation3], 128
    $region9: #{tpu_custom_call.1} parent=1 // pred_fallthru
      _
    %v23 = vlaneseq
    %v24 = vand.u32 %v23, 127
    %v25 = vand.u32 %v24, 63
    %v26 = vand.u32 %v25, 31
    %v27 = vshra.s32 %v26, 1
    %v28 = vcvt.s32.f32 %v27
    %v29 = vmul.f32 %v28, -0.5756463
    %v30 = vmul.f32 %v29, 1.442695
    %v31 = vpow.pop %v30
    %vm32 = vcmp.ge.s32.totalorder %v25, 32
    %v33 = vsel %vm32, 1.5707964, 0.0
    %vm34 = vcmp.lt.s32.totalorder %v24, 64
    %v35 = vld [vmem:[#allocation2] sm:$0xff]
    %37 = vset.pattern.permute.xlu0 0
    %38 = vperm.xlu0 %37, %v35
    %v39 = vpop.permute.xlu0 %38
    %41 = vset.pattern.permute.xlu0 1
    %42 = vperm.xlu0 %41, %v35
    %v43 = vpop.permute.xlu0 %42
    %v45 = vsel %vm34, 1, 0
    %vm46 = vcmp.eq.s32.totalorder %v45, 1
    %v47 = vsel %vm46, %v39, %v43
    %v48 = vmul.f32 %v47, %v31
    %v49 = vadd.f32 %v48, %v33
    %v50 = vand.u32 2147483647, %v49
    %vm51 = vcmp.le.f32.partialorder %v50, 0.7853982
    %vm52 = vcmp.lt.s32.totalorder %v49, 0
    %v53 = vand.u32 %v49, 2139095040
    %v54 = vshrl.u32 %v53, 23
    %v55 = vsub.s32 %v54, 127
    %v56 = vand.u32 2147483647, %v49
    %v57 = vand.u32 %v56, 8388607
    %v58 = vor.u32 %v57, 8388608
    %v59 = vsub.s32 0, %v58
    %v60 = vadd.s32 %v55, 1
    %vm61 = vcmp.gt.s32.totalorder %v60, 0
    %v62 = vsel %vm61, %v60, 0
    %v63 = vshrl.u32 %v62, 5
    %v64 = vand.u32 %v62, 31
    %v65 = vsub.s32 32, %v64
    %v66 = vshrl.u32 683565275, %v65
    %v67 = vshll.u32 683565275, %v64
    %v68 = vshrl.u32 2475754826, %v65
    %v69 = vor.u32 %v67, %v68
    %v70 = vshll.u32 2475754826, %v64
    %v71 = vshrl.u32 2131351028, %v65
    %v72 = vor.u32 %v70, %v71
    %v73 = vshll.u32 2131351028, %v64
    %v74 = vshrl.u32 2102212464, %v65
    %v75 = vor.u32 %v73, %v74
    %v76 = vshll.u32 2102212464, %v64
    %v77 = vshrl.u32 920167782, %v65
    %v78 = vor.u32 %v76, %v77
    %v79 = vshll.u32 920167782, %v64
    %v80 = vshrl.u32 1326507024, %v65
    %v81 = vor.u32 %v79, %v80
    %vm82 = vcmp.lt.s32.totalorder %v63, 1
    %vm83 = vcmp.lt.s32.totalorder %v63, 2
    %vm84 = vcmp.lt.s32.totalorder %v63, 3
    %vm85 = vcmp.lt.s32.totalorder %v63, 4
    %v86 = vsel %vm82, %v66, %v69
    %v87 = vsel %vm85, %v75, 2102212464
    %v88 = vsel %vm84, %v72, %v87
    %v89 = vsel %vm83, %v86, %v88
    %v90 = vsel %vm82, %v69, %v72
    %v91 = vsel %vm85, %v78, 920167782
    %v92 = vsel %vm84, %v75, %v91
    %v93 = vsel %vm83, %v90, %v92
    %v94 = vsel %vm82, %v72, %v75
    %v95 = vsel %vm85, %v81, 1326507024
    %v96 = vsel %vm84, %v78, %v95
    %v97 = vsel %vm83, %v94, %v96
    %v98 = vshll.u32 %v58, 8
    %v99 = vand.u32 %v98, 65535
    %v100 = vshrl.u32 %v98, 16
    %v101 = vand.u32 %v97, 65535
    %v102 = vshrl.u32 %v97, 16
    %v103 = vmul.u32 %v99, %v101
    %v104 = vmul.u32 %v99, %v102
    %v105 = vmul.u32 %v100, %v101
    %v106 = vmul.u32 %v100, %v102
    %v107 = vshll.u32 %v104, 16
    %v108 = vshrl.u32 %v104, 16
    %v109 = vshll.u32 %v105, 16
    %v110 = vshrl.u32 %v105, 16
    %vm111 = vc.u32 %v103, %v107
    %v112 = vsel %vm111, 1, 0
    %v113 = vadd.s32 %v103, %v107
    %v114 = vadd.s32 %v106, %v112
    %vm115 = vc.u32 %v113, %v109
    %v116 = vsel %vm115, 1, 0
    %v117 = vadd.s32 %v113, %v109
    %v118 = vadd.s32 %v114, %v116
    %v119 = vadd.s32 %v118, %v108
    %v120 = vadd.s32 %v119, %v110
    %v121 = vand.u32 %v98, 65535
    %v122 = vshrl.u32 %v98, 16
    %v123 = vand.u32 %v93, 65535
    %v124 = vshrl.u32 %v93, 16
    %v125 = vmul.u32 %v121, %v123
    %v126 = vmul.u32 %v121, %v124
    %v127 = vmul.u32 %v122, %v123
    %v128 = vmul.u32 %v122, %v124
    %v129 = vshll.u32 %v126, 16
    %v130 = vshrl.u32 %v126, 16
    %v131 = vshll.u32 %v127, 16
    %v132 = vshrl.u32 %v127, 16
    %vm133 = vc.u32 %v125, %v129
    %v134 = vsel %vm133, 1, 0
    %v135 = vadd.s32 %v125, %v129
    %v136 = vadd.s32 %v128, %v134
    %vm137 = vc.u32 %v135, %v131
    %v138 = vsel %vm137, 1, 0
    %v139 = vadd.s32 %v135, %v131
    %v140 = vadd.s32 %v136, %v138
    %v141 = vadd.s32 %v140, %v130
    %v142 = vadd.s32 %v141, %v132
    %v143 = vmul.u32 %v98, %v89
    %v144 = vadd.s32 %v120, %v139
    %vm145 = vc.u32 %v120, %v139
    %v146 = vadd.s32 %v142, 1
    %v147 = vsel %vm145, %v146, %v142
    %v148 = vadd.s32 %v143, %v147
    %v149 = vadd.s32 %v148, 536870912
    %v150 = vshrl.u32 %v149, 30
    %v151 = vshll.u32 %v150, 30
    %v152 = vsub.s32 %v148, %v151
    %vm153 = vcmp.lt.s32.totalorder %v152, 0
    %v154 = vsub.s32 0, %v152
    %v155 = vsel %vm153, %v154, %v152
    %v156 = vclz %v155
    %v157 = vsub.s32 %v156, 2
    %vm158 = vcmp.gt.s32.totalorder 0, %v157
    %v159 = vsel %vm158, 0, %v157
    %v160 = vsub.s32 32, %v159
    %v161 = vshll.u32 %v152, %v159
    %v162 = vshrl.u32 %v144, %v160
    %v163 = vor.u32 %v161, %v162
    %v164 = vsub.s32 4294967266, %v159
    %v165 = vadd.s32 %v164, 127
    %v166 = vshll.u32 %v165, 23
    %v167 = vor.u32 4788187, %v166
    %v168 = vand.u32 2147483647, %v167
    %v170 = vcvt.s32.f32 %v163
    %v171 = vmul.f32 %v170, %v168
    %v172 = vxor.u32 %v171, 2147483648
    %v173 = vsel %vm52, %v172, %v171
    %v174 = vsub.s32 4, %v150
    %v175 = vsel %vm52, %v174, %v150
    %v176 = vsel %vm51, %v49, %v173
    %v177 = vsel %vm51, 0, %v175
    %v178 = vmul.f32 %v176, %v176
    %v179 = vmul.f32 %v178, -0.001358992
    %v180 = vadd.f32 %v179, 0.041655596
    %v181 = vmul.f32 %v178, %v180
    %v182 = vadd.f32 %v181, -0.4999988
    %v183 = vmul.f32 %v178, %v182
    %v184 = vadd.f32 1.0, %v183
    %v185 = vmul.f32 %v176, %v176
    %v186 = vmul.f32 %v185, -0.00019511016
    %v187 = vadd.f32 %v186, 0.008332121
    %v188 = vmul.f32 %v185, %v187
    %v189 = vadd.f32 %v188, -0.16666654
    %v190 = vmul.f32 %v185, %v189
    %v191 = vadd.f32 %v190, 1.0
    %v192 = vmul.f32 %v191, %v176
    %vm193 = vweird.f32 %v49
    %v194 = vadd.s32 %v177, 3
    %v195 = vand.u32 %v194, 3
    %vm196 = vcmp.lt.s32.totalorder %v195, 2
    %vm197 = vcmp.eq.s32.totalorder %v195, 0
    %v198 = vxor.u32 %v192, 2147483648
    %v199 = vsel %vm197, %v184, %v198
    %vm200 = vcmp.eq.s32.totalorder %v195, 2
    %v201 = vxor.u32 %v184, 2147483648
    %v202 = vsel %vm200, %v201, %v192
    %v203 = vsel %vm196, %v199, %v202
    %v204 = vsel %vm193, nan, %v203
    %205 = vst [vmem:[#allocation5] sm:$0xff] %v204
    %v206 = vld [vmem:[#allocation2] sm:$0xff]
    %208 = vset.pattern.permute.xlu0 2
    %209 = vperm.xlu0 %208, %v206
    %v210 = vpop.permute.xlu0 %209
    %212 = vset.pattern.permute.xlu0 3
    %213 = vperm.xlu0 %212, %v206
    %v214 = vpop.permute.xlu0 %213
    %v216 = vsel %vm46, %v210, %v214
    %v217 = vmul.f32 %v216, %v31
    %v218 = vadd.f32 %v217, %v33
    %v219 = vand.u32 2147483647, %v218
    %vm220 = vcmp.le.f32.partialorder %v219, 0.7853982
    %vm221 = vcmp.lt.s32.totalorder %v218, 0
    %v222 = vand.u32 %v218, 2139095040
    %v223 = vshrl.u32 %v222, 23
    %v224 = vsub.s32 %v223, 127
    %v225 = vand.u32 2147483647, %v218
    %v226 = vand.u32 %v225, 8388607
    %v227 = vor.u32 %v226, 8388608
    %v228 = vsub.s32 0, %v227
    %v229 = vadd.s32 %v224, 1
    %vm230 = vcmp.gt.s32.totalorder %v229, 0
    %v231 = vsel %vm230, %v229, 0
    %v232 = vshrl.u32 %v231, 5
    %v233 = vand.u32 %v231, 31
    %v234 = vsub.s32 32, %v233
    %v235 = vshrl.u32 683565275, %v234
    %v236 = vshll.u32 683565275, %v233
    %v237 = vshrl.u32 2475754826, %v234
    %v238 = vor.u32 %v236, %v237
    %v239 = vshll.u32 2475754826, %v233
    %v240 = vshrl.u32 2131351028, %v234
    %v241 = vor.u32 %v239, %v240
    %v242 = vshll.u32 2131351028, %v233
    %v243 = vshrl.u32 2102212464, %v234
    %v244 = vor.u32 %v242, %v243
    %v245 = vshll.u32 2102212464, %v233
    %v246 = vshrl.u32 920167782, %v234
    %v247 = vor.u32 %v245, %v246
    %v248 = vshll.u32 920167782, %v233
    %v249 = vshrl.u32 1326507024, %v234
    %v250 = vor.u32 %v248, %v249
    %vm251 = vcmp.lt.s32.totalorder %v232, 1
    %vm252 = vcmp.lt.s32.totalorder %v232, 2
    %vm253 = vcmp.lt.s32.totalorder %v232, 3
    %vm254 = vcmp.lt.s32.totalorder %v232, 4
    %v255 = vsel %vm251, %v235, %v238
    %v256 = vsel %vm254, %v244, 2102212464
    %v257 = vsel %vm253, %v241, %v256
    %v258 = vsel %vm252, %v255, %v257
    %v259 = vsel %vm251, %v238, %v241
    %v260 = vsel %vm254, %v247, 920167782
    %v261 = vsel %vm253, %v244, %v260
    %v262 = vsel %vm252, %v259, %v261
    %v263 = vsel %vm251, %v241, %v244
    %v264 = vsel %vm254, %v250, 1326507024
    %v265 = vsel %vm253, %v247, %v264
    %v266 = vsel %vm252, %v263, %v265
    %v267 = vshll.u32 %v227, 8
    %v268 = vand.u32 %v267, 65535
    %v269 = vshrl.u32 %v267, 16
    %v270 = vand.u32 %v266, 65535
    %v271 = vshrl.u32 %v266, 16
    %v272 = vmul.u32 %v268, %v270
    %v273 = vmul.u32 %v268, %v271
    %v274 = vmul.u32 %v269, %v270
    %v275 = vmul.u32 %v269, %v271
    %v276 = vshll.u32 %v273, 16
    %v277 = vshrl.u32 %v273, 16
    %v278 = vshll.u32 %v274, 16
    %v279 = vshrl.u32 %v274, 16
    %vm280 = vc.u32 %v272, %v276
    %v281 = vsel %vm280, 1, 0
    %v282 = vadd.s32 %v272, %v276
    %v283 = vadd.s32 %v275, %v281
    %vm284 = vc.u32 %v282, %v278
    %v285 = vsel %vm284, 1, 0
    %v286 = vadd.s32 %v282, %v278
    %v287 = vadd.s32 %v283, %v285
    %v288 = vadd.s32 %v287, %v277
    %v289 = vadd.s32 %v288, %v279
    %v290 = vand.u32 %v267, 65535
    %v291 = vshrl.u32 %v267, 16
    %v292 = vand.u32 %v262, 65535
    %v293 = vshrl.u32 %v262, 16
    %v294 = vmul.u32 %v290, %v292
    %v295 = vmul.u32 %v290, %v293
    %v296 = vmul.u32 %v291, %v292
    %v297 = vmul.u32 %v291, %v293
    %v298 = vshll.u32 %v295, 16
    %v299 = vshrl.u32 %v295, 16
    %v300 = vshll.u32 %v296, 16
    %v301 = vshrl.u32 %v296, 16
    %vm302 = vc.u32 %v294, %v298
    %v303 = vsel %vm302, 1, 0
    %v304 = vadd.s32 %v294, %v298
    %v305 = vadd.s32 %v297, %v303
    %vm306 = vc.u32 %v304, %v300
    %v307 = vsel %vm306, 1, 0
    %v308 = vadd.s32 %v304, %v300
    %v309 = vadd.s32 %v305, %v307
    %v310 = vadd.s32 %v309, %v299
    %v311 = vadd.s32 %v310, %v301
    %v312 = vmul.u32 %v267, %v258
    %v313 = vadd.s32 %v289, %v308
    %vm314 = vc.u32 %v289, %v308
    %v315 = vadd.s32 %v311, 1
    %v316 = vsel %vm314, %v315, %v311
    %v317 = vadd.s32 %v312, %v316
    %v318 = vadd.s32 %v317, 536870912
    %v319 = vshrl.u32 %v318, 30
    %v320 = vshll.u32 %v319, 30
    %v321 = vsub.s32 %v317, %v320
    %vm322 = vcmp.lt.s32.totalorder %v321, 0
    %v323 = vsub.s32 0, %v321
    %v324 = vsel %vm322, %v323, %v321
    %v325 = vclz %v324
    %v326 = vsub.s32 %v325, 2
    %vm327 = vcmp.gt.s32.totalorder 0, %v326
    %v328 = vsel %vm327, 0, %v326
    %v329 = vsub.s32 32, %v328
    %v330 = vshll.u32 %v321, %v328
    %v331 = vshrl.u32 %v313, %v329
    %v332 = vor.u32 %v330, %v331
    %v333 = vsub.s32 4294967266, %v328
    %v334 = vadd.s32 %v333, 127
    %v335 = vshll.u32 %v334, 23
    %v336 = vor.u32 4788187, %v335
    %v337 = vand.u32 2147483647, %v336
    %v339 = vcvt.s32.f32 %v332
    %v340 = vmul.f32 %v339, %v337
    %v341 = vxor.u32 %v340, 2147483648
    %v342 = vsel %vm221, %v341, %v340
    %v343 = vsub.s32 4, %v319
    %v344 = vsel %vm221, %v343, %v319
    %v345 = vsel %vm220, %v218, %v342
    %v346 = vsel %vm220, 0, %v344
    %v347 = vmul.f32 %v345, %v345
    %v348 = vmul.f32 %v347, -0.001358992
    %v349 = vadd.f32 %v348, 0.041655596
    %v350 = vmul.f32 %v347, %v349
    %v351 = vadd.f32 %v350, -0.4999988
    %v352 = vmul.f32 %v347, %v351
    %v353 = vadd.f32 1.0, %v352
    %v354 = vmul.f32 %v345, %v345
    %v355 = vmul.f32 %v354, -0.00019511016
    %v356 = vadd.f32 %v355, 0.008332121
    %v357 = vmul.f32 %v354, %v356
    %v358 = vadd.f32 %v357, -0.16666654
    %v359 = vmul.f32 %v354, %v358
    %v360 = vadd.f32 %v359, 1.0
    %v361 = vmul.f32 %v360, %v345
    %vm362 = vweird.f32 %v218
    %v363 = vadd.s32 %v346, 3
    %v364 = vand.u32 %v363, 3
    %vm365 = vcmp.lt.s32.totalorder %v364, 2
    %vm366 = vcmp.eq.s32.totalorder %v364, 0
    %v367 = vxor.u32 %v361, 2147483648
    %v368 = vsel %vm366, %v353, %v367
    %vm369 = vcmp.eq.s32.totalorder %v364, 2
    %v370 = vxor.u32 %v353, 2147483648
    %v371 = vsel %vm369, %v370, %v361
    %v372 = vsel %vm365, %v368, %v371
    %v373 = vsel %vm362, nan, %v372
    %374 = vst [vmem:[#allocation5 + $0x8] sm:$0xff] %v373
    %v375 = vld [vmem:[#allocation2] sm:$0xff]
    %377 = vset.pattern.permute.xlu0 4
    %378 = vperm.xlu0 %377, %v375
    %v379 = vpop.permute.xlu0 %378
    %381 = vset.pattern.permute.xlu0 5
    %382 = vperm.xlu0 %381, %v375
    %v383 = vpop.permute.xlu0 %382
    %v385 = vsel %vm46, %v379, %v383
    %v386 = vmul.f32 %v385, %v31
    %v387 = vadd.f32 %v386, %v33
    %v388 = vand.u32 2147483647, %v387
    %vm389 = vcmp.le.f32.partialorder %v388, 0.7853982
    %vm390 = vcmp.lt.s32.totalorder %v387, 0
    %v391 = vand.u32 %v387, 2139095040
    %v392 = vshrl.u32 %v391, 23
    %v393 = vsub.s32 %v392, 127
    %v394 = vand.u32 2147483647, %v387
    %v395 = vand.u32 %v394, 8388607
    %v396 = vor.u32 %v395, 8388608
    %v397 = vsub.s32 0, %v396
    %v398 = vadd.s32 %v393, 1
    %vm399 = vcmp.gt.s32.totalorder %v398, 0
    %v400 = vsel %vm399, %v398, 0
    %v401 = vshrl.u32 %v400, 5
    %v402 = vand.u32 %v400, 31
    %v403 = vsub.s32 32, %v402
    %v404 = vshrl.u32 683565275, %v403
    %v405 = vshll.u32 683565275, %v402
    %v406 = vshrl.u32 2475754826, %v403
    %v407 = vor.u32 %v405, %v406
    %v408 = vshll.u32 2475754826, %v402
    %v409 = vshrl.u32 2131351028, %v403
    %v410 = vor.u32 %v408, %v409
    %v411 = vshll.u32 2131351028, %v402
    %v412 = vshrl.u32 2102212464, %v403
    %v413 = vor.u32 %v411, %v412
    %v414 = vshll.u32 2102212464, %v402
    %v415 = vshrl.u32 920167782, %v403
    %v416 = vor.u32 %v414, %v415
    %v417 = vshll.u32 920167782, %v402
    %v418 = vshrl.u32 1326507024, %v403
    %v419 = vor.u32 %v417, %v418
    %vm420 = vcmp.lt.s32.totalorder %v401, 1
    %vm421 = vcmp.lt.s32.totalorder %v401, 2
    %vm422 = vcmp.lt.s32.totalorder %v401, 3
    %vm423 = vcmp.lt.s32.totalorder %v401, 4
    %v424 = vsel %vm420, %v404, %v407
    %v425 = vsel %vm423, %v413, 2102212464
    %v426 = vsel %vm422, %v410, %v425
    %v427 = vsel %vm421, %v424, %v426
    %v428 = vsel %vm420, %v407, %v410
    %v429 = vsel %vm423, %v416, 920167782
    %v430 = vsel %vm422, %v413, %v429
    %v431 = vsel %vm421, %v428, %v430
    %v432 = vsel %vm420, %v410, %v413
    %v433 = vsel %vm423, %v419, 1326507024
    %v434 = vsel %vm422, %v416, %v433
    %v435 = vsel %vm421, %v432, %v434
    %v436 = vshll.u32 %v396, 8
    %v437 = vand.u32 %v436, 65535
    %v438 = vshrl.u32 %v436, 16
    %v439 = vand.u32 %v435, 65535
    %v440 = vshrl.u32 %v435, 16
    %v441 = vmul.u32 %v437, %v439
    %v442 = vmul.u32 %v437, %v440
    %v443 = vmul.u32 %v438, %v439
    %v444 = vmul.u32 %v438, %v440
    %v445 = vshll.u32 %v442, 16
    %v446 = vshrl.u32 %v442, 16
    %v447 = vshll.u32 %v443, 16
    %v448 = vshrl.u32 %v443, 16
    %vm449 = vc.u32 %v441, %v445
    %v450 = vsel %vm449, 1, 0
    %v451 = vadd.s32 %v441, %v445
    %v452 = vadd.s32 %v444, %v450
    %vm453 = vc.u32 %v451, %v447
    %v454 = vsel %vm453, 1, 0
    %v455 = vadd.s32 %v451, %v447
    %v456 = vadd.s32 %v452, %v454
    %v457 = vadd.s32 %v456, %v446
    %v458 = vadd.s32 %v457, %v448
    %v459 = vand.u32 %v436, 65535
    %v460 = vshrl.u32 %v436, 16
    %v461 = vand.u32 %v431, 65535
    %v462 = vshrl.u32 %v431, 16
    %v463 = vmul.u32 %v459, %v461
    %v464 = vmul.u32 %v459, %v462
    %v465 = vmul.u32 %v460, %v461
    %v466 = vmul.u32 %v460, %v462
    %v467 = vshll.u32 %v464, 16
    %v468 = vshrl.u32 %v464, 16
    %v469 = vshll.u32 %v465, 16
    %v470 = vshrl.u32 %v465, 16
    %vm471 = vc.u32 %v463, %v467
    %v472 = vsel %vm471, 1, 0
    %v473 = vadd.s32 %v463, %v467
    %v474 = vadd.s32 %v466, %v472
    %vm475 = vc.u32 %v473, %v469
    %v476 = vsel %vm475, 1, 0
    %v477 = vadd.s32 %v473, %v469
    %v478 = vadd.s32 %v474, %v476
    %v479 = vadd.s32 %v478, %v468
    %v480 = vadd.s32 %v479, %v470
    %v481 = vmul.u32 %v436, %v427
    %v482 = vadd.s32 %v458, %v477
    %vm483 = vc.u32 %v458, %v477
    %v484 = vadd.s32 %v480, 1
    %v485 = vsel %vm483, %v484, %v480
    %v486 = vadd.s32 %v481, %v485
    %v487 = vadd.s32 %v486, 536870912
    %v488 = vshrl.u32 %v487, 30
    %v489 = vshll.u32 %v488, 30
    %v490 = vsub.s32 %v486, %v489
    %vm491 = vcmp.lt.s32.totalorder %v490, 0
    %v492 = vsub.s32 0, %v490
    %v493 = vsel %vm491, %v492, %v490
    %v494 = vclz %v493
    %v495 = vsub.s32 %v494, 2
    %vm496 = vcmp.gt.s32.totalorder 0, %v495
    %v497 = vsel %vm496, 0, %v495
    %v498 = vsub.s32 32, %v497
    %v499 = vshll.u32 %v490, %v497
    %v500 = vshrl.u32 %v482, %v498
    %v501 = vor.u32 %v499, %v500
    %v502 = vsub.s32 4294967266, %v497
    %v503 = vadd.s32 %v502, 127
    %v504 = vshll.u32 %v503, 23
    %v505 = vor.u32 4788187, %v504
    %v506 = vand.u32 2147483647, %v505
    %v508 = vcvt.s32.f32 %v501
    %v509 = vmul.f32 %v508, %v506
    %v510 = vxor.u32 %v509, 2147483648
    %v511 = vsel %vm390, %v510, %v509
    %v512 = vsub.s32 4, %v488
    %v513 = vsel %vm390, %v512, %v488
    %v514 = vsel %vm389, %v387, %v511
    %v515 = vsel %vm389, 0, %v513
    %v516 = vmul.f32 %v514, %v514
    %v517 = vmul.f32 %v516, -0.001358992
    %v518 = vadd.f32 %v517, 0.041655596
    %v519 = vmul.f32 %v516, %v518
    %v520 = vadd.f32 %v519, -0.4999988
    %v521 = vmul.f32 %v516, %v520
    %v522 = vadd.f32 1.0, %v521
    %v523 = vmul.f32 %v514, %v514
    %v524 = vmul.f32 %v523, -0.00019511016
    %v525 = vadd.f32 %v524, 0.008332121
    %v526 = vmul.f32 %v523, %v525
    %v527 = vadd.f32 %v526, -0.16666654
    %v528 = vmul.f32 %v523, %v527
    %v529 = vadd.f32 %v528, 1.0
    %v530 = vmul.f32 %v529, %v514
    %vm531 = vweird.f32 %v387
    %v532 = vadd.s32 %v515, 3
    %v533 = vand.u32 %v532, 3
    %vm534 = vcmp.lt.s32.totalorder %v533, 2
    %vm535 = vcmp.eq.s32.totalorder %v533, 0
    %v536 = vxor.u32 %v530, 2147483648
    %v537 = vsel %vm535, %v522, %v536
    %vm538 = vcmp.eq.s32.totalorder %v533, 2
    %v539 = vxor.u32 %v522, 2147483648
    %v540 = vsel %vm538, %v539, %v530
    %v541 = vsel %vm534, %v537, %v540
    %v542 = vsel %vm531, nan, %v541
    %543 = vst [vmem:[#allocation5 + $0x10] sm:$0xff] %v542
    %v544 = vld [vmem:[#allocation2] sm:$0xff]
    %546 = vset.pattern.permute.xlu0 6
    %547 = vperm.xlu0 %546, %v544
    %v548 = vpop.permute.xlu0 %547
    %550 = vset.pattern.permute.xlu0 7
    %551 = vperm.xlu0 %550, %v544
    %v552 = vpop.permute.xlu0 %551
    %v554 = vsel %vm46, %v548, %v552
    %v555 = vmul.f32 %v554, %v31
    %v556 = vadd.f32 %v555, %v33
    %v557 = vand.u32 2147483647, %v556
    %vm558 = vcmp.le.f32.partialorder %v557, 0.7853982
    %vm559 = vcmp.lt.s32.totalorder %v556, 0
    %v560 = vand.u32 %v556, 2139095040
    %v561 = vshrl.u32 %v560, 23
    %v562 = vsub.s32 %v561, 127
    %v563 = vand.u32 2147483647, %v556
    %v564 = vand.u32 %v563, 8388607
    %v565 = vor.u32 %v564, 8388608
    %v566 = vsub.s32 0, %v565
    %v567 = vadd.s32 %v562, 1
    %vm568 = vcmp.gt.s32.totalorder %v567, 0
    %v569 = vsel %vm568, %v567, 0
    %v570 = vshrl.u32 %v569, 5
    %v571 = vand.u32 %v569, 31
    %v572 = vsub.s32 32, %v571
    %v573 = vshrl.u32 683565275, %v572
    %v574 = vshll.u32 683565275, %v571
    %v575 = vshrl.u32 2475754826, %v572
    %v576 = vor.u32 %v574, %v575
    %v577 = vshll.u32 2475754826, %v571
    %v578 = vshrl.u32 2131351028, %v572
    %v579 = vor.u32 %v577, %v578
    %v580 = vshll.u32 2131351028, %v571
    %v581 = vshrl.u32 2102212464, %v572
    %v582 = vor.u32 %v580, %v581
    %v583 = vshll.u32 2102212464, %v571
    %v584 = vshrl.u32 920167782, %v572
    %v585 = vor.u32 %v583, %v584
    %v586 = vshll.u32 920167782, %v571
    %v587 = vshrl.u32 1326507024, %v572
    %v588 = vor.u32 %v586, %v587
    %vm589 = vcmp.lt.s32.totalorder %v570, 1
    %vm590 = vcmp.lt.s32.totalorder %v570, 2
    %vm591 = vcmp.lt.s32.totalorder %v570, 3
    %vm592 = vcmp.lt.s32.totalorder %v570, 4
    %v593 = vsel %vm589, %v573, %v576
    %v594 = vsel %vm592, %v582, 2102212464
    %v595 = vsel %vm591, %v579, %v594
    %v596 = vsel %vm590, %v593, %v595
    %v597 = vsel %vm589, %v576, %v579
    %v598 = vsel %vm592, %v585, 920167782
    %v599 = vsel %vm591, %v582, %v598
    %v600 = vsel %vm590, %v597, %v599
    %v601 = vsel %vm589, %v579, %v582
    %v602 = vsel %vm592, %v588, 1326507024
    %v603 = vsel %vm591, %v585, %v602
    %v604 = vsel %vm590, %v601, %v603
    %v605 = vshll.u32 %v565, 8
    %v606 = vand.u32 %v605, 65535
    %v607 = vshrl.u32 %v605, 16
    %v608 = vand.u32 %v604, 65535
    %v609 = vshrl.u32 %v604, 16
    %v610 = vmul.u32 %v606, %v608
    %v611 = vmul.u32 %v606, %v609
    %v612 = vmul.u32 %v607, %v608
    %v613 = vmul.u32 %v607, %v609
    %v614 = vshll.u32 %v611, 16
    %v615 = vshrl.u32 %v611, 16
    %v616 = vshll.u32 %v612, 16
    %v617 = vshrl.u32 %v612, 16
    %vm618 = vc.u32 %v610, %v614
    %v619 = vsel %vm618, 1, 0
    %v620 = vadd.s32 %v610, %v614
    %v621 = vadd.s32 %v613, %v619
    %vm622 = vc.u32 %v620, %v616
    %v623 = vsel %vm622, 1, 0
    %v624 = vadd.s32 %v620, %v616
    %v625 = vadd.s32 %v621, %v623
    %v626 = vadd.s32 %v625, %v615
    %v627 = vadd.s32 %v626, %v617
    %v628 = vand.u32 %v605, 65535
    %v629 = vshrl.u32 %v605, 16
    %v630 = vand.u32 %v600, 65535
    %v631 = vshrl.u32 %v600, 16
    %v632 = vmul.u32 %v628, %v630
    %v633 = vmul.u32 %v628, %v631
    %v634 = vmul.u32 %v629, %v630
    %v635 = vmul.u32 %v629, %v631
    %v636 = vshll.u32 %v633, 16
    %v637 = vshrl.u32 %v633, 16
    %v638 = vshll.u32 %v634, 16
    %v639 = vshrl.u32 %v634, 16
    %vm640 = vc.u32 %v632, %v636
    %v641 = vsel %vm640, 1, 0
    %v642 = vadd.s32 %v632, %v636
    %v643 = vadd.s32 %v635, %v641
    %vm644 = vc.u32 %v642, %v638
    %v645 = vsel %vm644, 1, 0
    %v646 = vadd.s32 %v642, %v638
    %v647 = vadd.s32 %v643, %v645
    %v648 = vadd.s32 %v647, %v637
    %v649 = vadd.s32 %v648, %v639
    %v650 = vmul.u32 %v605, %v596
    %v651 = vadd.s32 %v627, %v646
    %vm652 = vc.u32 %v627, %v646
    %v653 = vadd.s32 %v649, 1
    %v654 = vsel %vm652, %v653, %v649
    %v655 = vadd.s32 %v650, %v654
    %v656 = vadd.s32 %v655, 536870912
    %v657 = vshrl.u32 %v656, 30
    %v658 = vshll.u32 %v657, 30
    %v659 = vsub.s32 %v655, %v658
    %vm660 = vcmp.lt.s32.totalorder %v659, 0
    %v661 = vsub.s32 0, %v659
    %v662 = vsel %vm660, %v661, %v659
    %v663 = vclz %v662
    %v664 = vsub.s32 %v663, 2
    %vm665 = vcmp.gt.s32.totalorder 0, %v664
    %v666 = vsel %vm665, 0, %v664
    %v667 = vsub.s32 32, %v666
    %v668 = vshll.u32 %v659, %v666
    %v669 = vshrl.u32 %v651, %v667
    %v670 = vor.u32 %v668, %v669
    %v671 = vsub.s32 4294967266, %v666
    %v672 = vadd.s32 %v671, 127
    %v673 = vshll.u32 %v672, 23
    %v674 = vor.u32 4788187, %v673
    %v675 = vand.u32 2147483647, %v674
    %v677 = vcvt.s32.f32 %v670
    %v678 = vmul.f32 %v677, %v675
    %v679 = vxor.u32 %v678, 2147483648
    %v680 = vsel %vm559, %v679, %v678
    %v681 = vsub.s32 4, %v657
    %v682 = vsel %vm559, %v681, %v657
    %v683 = vsel %vm558, %v556, %v680
    %v684 = vsel %vm558, 0, %v682
    %v685 = vmul.f32 %v683, %v683
    %v686 = vmul.f32 %v685, -0.001358992
    %v687 = vadd.f32 %v686, 0.041655596
    %v688 = vmul.f32 %v685, %v687
    %v689 = vadd.f32 %v688, -0.4999988
    %v690 = vmul.f32 %v685, %v689
    %v691 = vadd.f32 1.0, %v690
    %v692 = vmul.f32 %v683, %v683
    %v693 = vmul.f32 %v692, -0.00019511016
    %v694 = vadd.f32 %v693, 0.008332121
    %v695 = vmul.f32 %v692, %v694
    %v696 = vadd.f32 %v695, -0.16666654
    %v697 = vmul.f32 %v692, %v696
    %v698 = vadd.f32 %v697, 1.0
    %v699 = vmul.f32 %v698, %v683
    %vm700 = vweird.f32 %v556
    %v701 = vadd.s32 %v684, 3
    %v702 = vand.u32 %v701, 3
    %vm703 = vcmp.lt.s32.totalorder %v702, 2
    %vm704 = vcmp.eq.s32.totalorder %v702, 0
    %v705 = vxor.u32 %v699, 2147483648
    %v706 = vsel %vm704, %v691, %v705
    %vm707 = vcmp.eq.s32.totalorder %v702, 2
    %v708 = vxor.u32 %v691, 2147483648
    %v709 = vsel %vm707, %v708, %v699
    %v710 = vsel %vm703, %v706, %v709
    %v711 = vsel %vm700, nan, %v710
    %712 = vst [vmem:[#allocation5 + $0x18] sm:$0xff] %v711
    // Predicated region
    $region10: #{tpu_custom_call.1} parent=1 // pred_check
      _
    $region11: #{tpu_custom_call.1} parent=1 // pred_check_branch
      %714 = sbr.rel (0) target = $region13
    $region12: #{tpu_custom_call.1} parent=1 // pred_region
      %716 = vsyncadd [#allocation4], 0
      %s718 = sshll.u32 [#allocation5], 4
      %s719 = int_to_ptr.vmem [resolvable:$true] %s718
      %s720 = sshll.u32 %s1, 4
      %s721 = int_to_ptr.hbm [resolvable:$true] %s720
      %723 = dma.vmem_to_hbm [thread:$0]  %s719, 512, %s721, [#allocation4]
    $region13: #{tpu_custom_call.1} parent=1 // pred_fallthru
      _
    // Predicated region
    $region14: #{tpu_custom_call.1} parent=1 // pred_check
      _
    $region15: #{tpu_custom_call.1} parent=1 // pred_check_branch
      %725 = sbr.rel (0) target = $region17
    $region16: #{tpu_custom_call.1} parent=1 // pred_region
      %727 = dma.done [#allocation4], 512
    $region17: #{tpu_custom_call.1} parent=1 // pred_fallthru
      _
    %728 = vsyncpa [#allocation3], 1
    %729 = vsyncpa [#allocation4], 1

</llo_original>
